<compile_context>
chip_gen: v6e
topology: v6e:2x2x1
jax: 0.10.0
libtpu: 0.0.40
codegen_flags: <defaults>
</compile_context>

<pallas_src>
import functools

import jax
import jax.numpy as jnp
from jax.experimental import pallas as pl
from jax.experimental.pallas import tpu as pltpu


def _round_up(x: int, m: int) -> int:
    return ((x + m - 1) // m) * m


def _fused_avg_kernel(mask_ref, emb_ref, out_ref, *, ke: int, he: int):
    """One row-tile of [ent_feat | rel_feat] = (mask @ blockdiag(E_e, E_r)) * (1/deg).

    mask_ref: (TM, Ke+Kr) bf16 0/1  (ent columns [0,Ke), rel columns [Ke,Ke+Kr))
    emb_ref : (Ke+Kr, He+Hr) f32    block-diagonal [[ent_emb, 0], [0, rel_emb]]
    out_ref : (TM, He+Hr) f32
    """
    # bf16 0/1 -> f32 is exact; bf16 only serves to halve the mask HBM bytes.
    m = mask_ref[...].astype(jnp.float32)

    # Single MXU matmul produces the already-concatenated feature block
    # (the off-diagonal zero blocks contribute exact zeros).
    s = jnp.dot(m, emb_ref[...], preferred_element_type=jnp.float32)

    # Row degrees of each adjacency. torch.sparse.softmax over all-ones values
    # is exactly a uniform 1/deg weighting of the nonzeros.
    col_k = jax.lax.broadcasted_iota(jnp.int32, m.shape, 1)
    deg_e = jnp.sum(jnp.where(col_k < ke, m, 0.0), axis=1, keepdims=True)
    deg_r = jnp.sum(m, axis=1, keepdims=True) - deg_e

    # Output-side normalization: O(TM*H) instead of O(TM*K) work on the mask
    # tile. Rows with no nonzeros stay exactly zero (matches torch.sparse.mm
    # over an empty softmax row). The reciprocal acts only on a (TM, 1)
    # column, so it is off the critical path; exact (approx=False) keeps the
    # reference-check numerics (approx=True would use the otherwise-idle EUP
    # slot but rounds differently — negligible win on a (TM,1) column).
    inv_e = jnp.where(deg_e > 0.0, pl.reciprocal(jnp.maximum(deg_e, 1.0)), 0.0)
    inv_r = jnp.where(deg_r > 0.0, pl.reciprocal(jnp.maximum(deg_r, 1.0)), 0.0)

    # Per-column scale selecting 1/deg_e for the ent half and 1/deg_r for the
    # rel half, then one full-width (lane-dense) store of the fused block.
    col_h = jax.lax.broadcasted_iota(jnp.int32, s.shape, 1)
    scale = jnp.where(col_h < he,
                      jnp.broadcast_to(inv_e, s.shape),
                      jnp.broadcast_to(inv_r, s.shape))
    out_ref[...] = (s * scale).astype(out_ref.dtype)


def fused_sparse_softmax_avg(mask, emb_blockdiag, ke, he, *, tm_max=512):
    """Fused avg() + avg_r(): uniform row sparse-softmax (all-ones adjacency
    given as a dense bf16 0/1 mask) followed by matmul, for both adjacencies
    at once via a column-concatenated mask and block-diagonal embeddings."""
    n, ktot = mask.shape
    ktot2, h_out = emb_blockdiag.shape
    assert ktot == ktot2

    # Large row tile: keeps the MXU fed and amortizes the ~0.35us/grid-step
    # overhead. Multiple of 16 (bf16 sublane packing); capped so real-sized
    # inputs still give several grid steps (v7x: 2 TCs share the parallel axis).
    tm = min(tm_max, _round_up(n, 16))
    n_pad = _round_up(n, tm)
    if n_pad != n:
        # zero-padded rows have deg == 0 -> exact zero output rows (sliced off)
        mask = jnp.pad(mask, ((0, n_pad - n), (0, 0)))

    # VMEM: double-buffered bf16 mask tile + resident f32 block-diag embedding
    # (constant index_map, still double-buffered) + f32 output tile.
    vmem_bytes = 2 * (tm * ktot * 2 + ktot * h_out * 4 + tm * h_out * 4)
    vmem_limit = int(min(64 * 1024 * 1024, max(32 * 1024 * 1024, 2 * vmem_bytes)))

    kernel = functools.partial(_fused_avg_kernel, ke=ke, he=he)
    out = pl.pallas_call(
        kernel,
        out_shape=jax.ShapeDtypeStruct((n_pad, h_out), jnp.float32),
        grid_spec=pltpu.PrefetchScalarGridSpec(
            num_scalar_prefetch=0,
            grid=(n_pad // tm,),
            in_specs=[
                # adjacency row-tile (bf16 halves the dominant HBM traffic)
                pl.BlockSpec((tm, ktot), lambda i: (i, 0)),
                # full block-diagonal embedding table, reused across steps
                pl.BlockSpec((ktot, h_out), lambda i: (0, 0)),
            ],
            out_specs=pl.BlockSpec((tm, h_out), lambda i: (i, 0)),
        ),
        compiler_params=pltpu.CompilerParams(
            dimension_semantics=("parallel",),
            vmem_limit_bytes=vmem_limit),
    )(mask, emb_blockdiag)
    return out[:n]


def st_encoder_forward(ent_adj, rel_adj, ent_emb_w, rel_emb_w,
                       node_size, rel_size):
    """Mirrors ST_Encoder_Module.forward.

    ent_adj: int32 (2, nnz_e) COO indices of a [node_size, node_size] sparse adj
    rel_adj: int32 (2, nnz_r) COO indices of a [node_size, rel_size]  sparse adj
    """
    ke, he = ent_emb_w.shape
    kr, hr = rel_emb_w.shape
    assert ke == node_size and kr == rel_size

    # Densify both COO adjacencies into ONE column-concatenated bf16 0/1 mask.
    # Duplicate COO entries collapse to 1, matching a coalesced all-ones sparse
    # tensor (documented assumption). At production graph sizes replace this
    # O(N^2) densification with a scalar-prefetch COO/CSR gather kernel.
    mask = jnp.zeros((node_size, ke + kr), jnp.bfloat16)
    mask = mask.at[ent_adj[0], ent_adj[1]].set(1.0)
    mask = mask.at[rel_adj[0], ke + rel_adj[1]].set(1.0)

    # Block-diagonal embeddings so one matmul yields [ent_feature | rel_feature].
    emb_bd = jnp.zeros((ke + kr, he + hr), jnp.float32)
    emb_bd = emb_bd.at[:ke, :he].set(ent_emb_w)
    emb_bd = emb_bd.at[ke:, he:].set(rel_emb_w)

    out_feature = fused_sparse_softmax_avg(mask, emb_bd, ke, he)

    # TODO(synk): NR_GraphAttention (self.e_encoder / self.r_encoder) has no
    # definition in the provided source; the encoder stage is omitted and the
    # avg features are concatenated directly (concat is fused into the kernel).
    # nn.Dropout(p=0.0) is the identity.
    return [out_feature]


if __name__ == "__main__":
    key = jax.random.PRNGKey(0)
    node_size, rel_size = 64, 16
    node_hidden, rel_hidden = 32, 32
    k1, k2, k3, k4, k5 = jax.random.split(key, 5)

    # deterministic xavier_uniform init (matches nn.init.xavier_uniform_ shapes)
    def xavier_uniform(k, shape):
        bound = (6.0 / (shape[0] + shape[1])) ** 0.5
        return jax.random.uniform(k, shape, jnp.float32, -bound, bound)

    ent_emb_w = xavier_uniform(k1, (node_size, node_hidden))   # ent_embedding.weight
    rel_emb_w = xavier_uniform(k2, (rel_size, rel_hidden))     # rel_embedding.weight

    # synthetic COO adjacencies: self-loops + random edges (every row nonempty)
    rows_e = jnp.concatenate([jnp.arange(node_size),
                              jax.random.randint(k3, (128,), 0, node_size)])
    cols_e = jnp.concatenate([jnp.arange(node_size),
                              jax.random.randint(k4, (128,), 0, node_size)])
    ent_adj = jnp.stack([rows_e, cols_e]).astype(jnp.int32)          # (2, 192)

    rows_r = jnp.repeat(jnp.arange(node_size), 2)
    cols_r = jax.random.randint(k5, (node_size * 2,), 0, rel_size)
    rel_adj = jnp.stack([rows_r, cols_r]).astype(jnp.int32)          # (2, 128)

    out = st_encoder_forward(ent_adj, rel_adj, ent_emb_w, rel_emb_w,
                             node_size, rel_size)
    out = [jax.block_until_ready(o) for o in out]
    out_feature = out[0]
    assert out_feature.shape == (node_size, node_hidden + rel_hidden)

    # pure-JAX reference of the avg()/avg_r() hot path (literal torch
    # semantics: row sparse-softmax over all-ones values, then sparse.mm),
    # computed at highest precision as ground truth.
    def ref_avg(adj, emb, n_rows, n_cols):
        m = jnp.zeros((n_rows, n_cols), jnp.float32).at[adj[0], adj[1]].set(1.0)
        deg = m.sum(1, keepdims=True)
        p = jnp.where(deg > 0, m / jnp.where(deg > 0, deg, 1.0), 0.0)
        return jnp.matmul(p, emb, precision=jax.lax.Precision.HIGHEST)

    ref = jnp.concatenate([
        ref_avg(ent_adj, ent_emb_w, node_size, node_size),
        ref_avg(rel_adj, rel_emb_w, node_size, rel_size),
    ], axis=-1)

    # Tolerance covers the case where the f32 MXU matmul is executed as bf16
    # passes (default matmul precision): the 0/1 mask is exact in bf16, only
    # the embedding operand can round (~2^-9 relative -> ~1e-3 absolute here).
    max_err = float(jnp.max(jnp.abs(out_feature - ref)))
    assert jnp.allclose(out_feature, ref, atol=3e-3, rtol=1e-2), max_err

    print("KERNEL_OK")
</pallas_src>

<mosaic_0001>
module attributes {stable_mosaic.version = 11 : i64} {
  func.func @_fused_avg_kernel(%arg0: i32, %arg1: memref<64x80xbf16, #tpu.memory_space<vmem>>, %arg2: memref<80x64xf32, #tpu.memory_space<vmem>>, %arg3: memref<64x64xf32, #tpu.memory_space<vmem>>) attributes {dimension_semantics = [#tpu.dimension_semantics<parallel>], iteration_bounds = array<i64: 1>, scalar_prefetch = 0 : i64, scratch_operands = 0 : i64, tpu.core_type = #tpu.core_type<tc>, window_params = [{transform_indices = @transform_0, window_bounds = array<i64: 64, 80>}, {pipeline_mode = #tpu.pipeline_mode<synchronous>, transform_indices = @transform_1, window_bounds = array<i64: 80, 64>}, {transform_indices = @transform_2, window_bounds = array<i64: 64, 64>}]} {
    %c0 = arith.constant 0 : index
    %c0_0 = arith.constant 0 : index
    %0 = vector.load %arg1[%c0, %c0_0] : memref<64x80xbf16, #tpu.memory_space<vmem>>, vector<64x80xbf16>
    %1 = arith.extf %0 : vector<64x80xbf16> to vector<64x80xf32>
    %c0_1 = arith.constant 0 : index
    %c0_2 = arith.constant 0 : index
    %2 = vector.load %arg2[%c0_1, %c0_2] : memref<80x64xf32, #tpu.memory_space<vmem>>, vector<80x64xf32>
    %cst = arith.constant dense<0.000000e+00> : vector<64x64xf32>
    %3 = tpu.matmul %1, %2, %cst {dimension_numbers = #tpu.dot_dimension_numbers<[1], [0], [0], [1], [0, 0, 1, 1], [], []>} : vector<64x80xf32>, vector<80x64xf32>, vector<64x64xf32> -> vector<64x64xf32>
    %4 = tpu.iota {dimensions = array<i32: 1>} : vector<64x80xi32>
    %c64_i32 = arith.constant 64 : i32
    %5 = vector.broadcast %c64_i32 : i32 to vector<64x80xi32>
    %6 = arith.cmpi slt, %4, %5 : vector<64x80xi32>
    %cst_3 = arith.constant 0.000000e+00 : f32
    %7 = vector.broadcast %cst_3 : f32 to vector<64x80xf32>
    %8 = arith.select %6, %1, %7 : vector<64x80xi1>, vector<64x80xf32>
    %cst_4 = arith.constant dense<0.000000e+00> : vector<64xf32>
    %9 = vector.multi_reduction <add>, %8, %cst_4 [1] : vector<64x80xf32> to vector<64xf32>
    %10 = vector.shape_cast %9 : vector<64xf32> to vector<64x1xf32>
    %cst_5 = arith.constant dense<0.000000e+00> : vector<64xf32>
    %11 = vector.multi_reduction <add>, %1, %cst_5 [1] : vector<64x80xf32> to vector<64xf32>
    %12 = vector.shape_cast %11 : vector<64xf32> to vector<64x1xf32>
    %13 = arith.subf %12, %10 : vector<64x1xf32>
    %cst_6 = arith.constant 0.000000e+00 : f32
    %14 = vector.broadcast %cst_6 : f32 to vector<64x1xf32>
    %15 = arith.cmpf ogt, %10, %14 : vector<64x1xf32>
    %cst_7 = arith.constant 1.000000e+00 : f32
    %16 = vector.broadcast %cst_7 : f32 to vector<64x1xf32>
    %17 = arith.maximumf %10, %16 : vector<64x1xf32>
    %18 = tpu.reciprocal %17 : vector<64x1xf32> -> vector<64x1xf32>
    %cst_8 = arith.constant 0.000000e+00 : f32
    %19 = vector.broadcast %cst_8 : f32 to vector<64x1xf32>
    %20 = arith.select %15, %18, %19 : vector<64x1xi1>, vector<64x1xf32>
    %cst_9 = arith.constant 0.000000e+00 : f32
    %21 = vector.broadcast %cst_9 : f32 to vector<64x1xf32>
    %22 = arith.cmpf ogt, %13, %21 : vector<64x1xf32>
    %cst_10 = arith.constant 1.000000e+00 : f32
    %23 = vector.broadcast %cst_10 : f32 to vector<64x1xf32>
    %24 = arith.maximumf %13, %23 : vector<64x1xf32>
    %25 = tpu.reciprocal %24 : vector<64x1xf32> -> vector<64x1xf32>
    %cst_11 = arith.constant 0.000000e+00 : f32
    %26 = vector.broadcast %cst_11 : f32 to vector<64x1xf32>
    %27 = arith.select %22, %25, %26 : vector<64x1xi1>, vector<64x1xf32>
    %28 = tpu.iota {dimensions = array<i32: 1>} : vector<64x64xi32>
    %c32_i32 = arith.constant 32 : i32
    %29 = vector.broadcast %c32_i32 : i32 to vector<64x64xi32>
    %30 = arith.cmpi slt, %28, %29 : vector<64x64xi32>
    %31 = vector.shape_cast %20 : vector<64x1xf32> to vector<64x1xf32>
    %32 = vector.broadcast %31 : vector<64x1xf32> to vector<64x64xf32>
    %33 = vector.shape_cast %27 : vector<64x1xf32> to vector<64x1xf32>
    %34 = vector.broadcast %33 : vector<64x1xf32> to vector<64x64xf32>
    %35 = arith.select %30, %32, %34 : vector<64x64xi1>, vector<64x64xf32>
    %36 = arith.mulf %3, %35 : vector<64x64xf32>
    %c0_12 = arith.constant 0 : index
    %c0_13 = arith.constant 0 : index
    %37 = vector.load %arg3[%c0_12, %c0_13] : memref<64x64xf32, #tpu.memory_space<vmem>>, vector<64x64xf32>
    tpu.vector_store %arg3[%c0_12, %c0_13], %36 {strides = array<i32>} : memref<64x64xf32, #tpu.memory_space<vmem>>, vector<64x64xf32>,
    return
  }
  func.func @transform_0(%arg0: i32) -> (i32, i32) {
    %c0_i32 = arith.constant 0 : i32
    %c0_i32_0 = arith.constant 0 : i32
    return %arg0, %c0_i32 : i32, i32
  }
  func.func @transform_1(%arg0: i32) -> (i32, i32) {
    %c0_i32 = arith.constant 0 : i32
    %c0_i32_0 = arith.constant 0 : i32
    %c0_i32_1 = arith.constant 0 : i32
    return %c0_i32, %c0_i32_0 : i32, i32
  }
  func.func @transform_2(%arg0: i32) -> (i32, i32) {
    %c0_i32 = arith.constant 0 : i32
    %c0_i32_0 = arith.constant 0 : i32
    return %arg0, %c0_i32 : i32, i32
  }
}

</mosaic_0001>

<llo_original>
// kernel: tpu_custom_call.1
$region0: #{tpu_custom_call.1}
  #allocation0 [shape = 'u32[]', space=smem, size = 0x4, offset = 0x4, fixed_abs, tag = 'smem constant byte address 0x4 - core index']
  #allocation1 [shape = 'u32[144,128]{1,0:T(1,128)}', space=vmem, size = 0x12000, scoped, tag = 'internal scratch']
  %s0 = inlined_call_operand.vmem [shape: bf16[64,80], index: 0, kind: input, shape index: {}]
  %s1 = inlined_call_operand.vmem [shape: f32[80,64], index: 1, kind: input, shape index: {}]
  %s2 = inlined_call_operand.hbm [shape: f32[64,64], index: 2, kind: output, shape index: {}]
  %s3 = sld [smem:[#allocation0]]
  $region18: #{tpu_custom_call.1} parent=0
    _
  %s5 = ssub.s32 1, %s3
  %s6 = scalar_select 0, %s5, %s3
  $region1: #{tpu_custom_call.1} parent=0
    #allocation2 [shape = 'u8[32768]{0}', space=vmem, size = 0x8000, scoped, tag = 'output window, operand 0, single buffered']
    #allocation3 [shape = 's32[1]{0}', space=sflag, size = 0x4, scoped, tag = 'scoped memory for tpu_custom_call.1']
    %7 = vsyncpa [#allocation3], 0
    // Predicated region
    $region2: #{tpu_custom_call.1} parent=1 // pred_check
      _
    $region3: #{tpu_custom_call.1} parent=1 // pred_check_branch
      %9 = sbr.rel (0) target = $region5
    $region4: #{tpu_custom_call.1} parent=1 // pred_region
      _
    $region5: #{tpu_custom_call.1} parent=1 // pred_fallthru
      _
    // Predicated region
    $region6: #{tpu_custom_call.1} parent=1 // pred_check
      _
    $region7: #{tpu_custom_call.1} parent=1 // pred_check_branch
      %11 = sbr.rel (0) target = $region9
    $region8: #{tpu_custom_call.1} parent=1 // pred_region
      _
    $region9: #{tpu_custom_call.1} parent=1 // pred_fallthru
      _
    %v12 = vld [vmem:[%s0] sm:$0xf]
    %v13 = vld [vmem:[%s0 + $0x4] sm:$0xf]
    %v14 = vld [vmem:[%s0 + $0x8] sm:$0xf]
    %v15 = vld [vmem:[%s0 + $0xc] sm:$0xf]
    %v16 = vld [vmem:[%s0 + $0x10] sm:$0xf]
    %v17 = vld [vmem:[%s0 + $0x14] sm:$0xf]
    %v18 = vld [vmem:[%s0 + $0x18] sm:$0xf]
    %v19 = vld [vmem:[%s0 + $0x1c] sm:$0xf]
    %v20 = vunpack.c.l.bf16 %v12
    %v21 = vunpack.c.l.bf16 %v13
    %v22 = vunpack.c.l.bf16 %v14
    %v23 = vunpack.c.l.bf16 %v15
    %v24 = vunpack.c.l.bf16 %v16
    %v25 = vunpack.c.l.bf16 %v17
    %v26 = vunpack.c.l.bf16 %v18
    %v27 = vunpack.c.l.bf16 %v19
    %v28 = vld [vmem:[%s1] sm:$0xff]
    %v29 = vld [vmem:[%s1 + $0x8] sm:$0xff]
    %v30 = vld [vmem:[%s1 + $0x10] sm:$0xff]
    %v31 = vld [vmem:[%s1 + $0x18] sm:$0xff]
    %v32 = vld [vmem:[%s1 + $0x20] sm:$0xff]
    %v33 = vld [vmem:[%s1 + $0x28] sm:$0xff]
    %v34 = vld [vmem:[%s1 + $0x30] sm:$0xff]
    %v35 = vld [vmem:[%s1 + $0x38] sm:$0xff]
    %v36 = vld [vmem:[%s1 + $0x40] sm:$0xff]
    %v37 = vld [vmem:[%s1 + $0x48] sm:$0xff]
    %vm38 = vcmask 654336
    %v40 = vsel %vm38, %v20, 0
    %v43 = vsel %vm38, %v21, 0
    %v46 = vsel %vm38, %v22, 0
    %v49 = vsel %vm38, %v23, 0
    %v52 = vsel %vm38, %v24, 0
    %v55 = vsel %vm38, %v25, 0
    %v58 = vsel %vm38, %v26, 0
    %v61 = vsel %vm38, %v27, 0
    %63 = vmatprep.subr.mxu0 0.0
    %64 = vmatpush1.msra.mxu0 0.0
    %65 = vmatprep.subr.mxu0 0.0
    %66 = vmatpush1.msra.mxu0 0.0
    %67 = vmatprep.subr.mxu0 0.0
    %68 = vmatpush1.msra.mxu0 0.0
    %69 = vmatprep.subr.mxu0 0.0
    %70 = vmatpush1.msra.mxu0 0.0
    %71 = vmatprep.subr.mxu0 0.0
    %72 = vmatpush1.msra.mxu0 0.0
    %73 = vmatprep.subr.mxu0 0.0
    %74 = vmatpush1.msra.mxu0 0.0
    %75 = vmatprep.subr.mxu0 0.0
    %76 = vmatpush1.msra.mxu0 %v37
    %77 = vmatprep.subr.mxu0 0.0
    %78 = vmatpush1.msra.mxu0 %v36
    %79 = vmatprep.subr.mxu0 0.0
    %80 = vmatpush1.msra.mxu0 %v35
    %81 = vmatprep.subr.mxu0 0.0
    %82 = vmatpush1.msra.mxu0 %v34
    %83 = vmatprep.subr.mxu0 0.0
    %84 = vmatpush1.msra.mxu0 %v33
    %85 = vmatprep.subr.mxu0 0.0
    %86 = vmatpush1.msra.mxu0 %v32
    %87 = vmatprep.subr.mxu0 0.0
    %88 = vmatpush1.msra.mxu0 %v31
    %89 = vmatprep.subr.mxu0 0.0
    %90 = vmatpush1.msra.mxu0 %v30
    %91 = vmatprep.subr.mxu0 0.0
    %92 = vmatpush1.msra.mxu0 %v29
    %93 = vmatprep.subr.mxu0 0.0
    %94 = vmatpush1.msra.mxu0 %v28
    %95 = vmatprep.subr.mxu0 0.0
    %96 = vmatpush2.msra.mxu0 0.0
    %97 = vmatprep.subr.mxu0 0.0
    %98 = vmatpush2.msra.mxu0 0.0
    %99 = vmatprep.subr.mxu0 0.0
    %100 = vmatpush2.msra.mxu0 0.0
    %101 = vmatprep.subr.mxu0 0.0
    %102 = vmatpush2.msra.mxu0 0.0
    %103 = vmatprep.subr.mxu0 0.0
    %104 = vmatpush2.msra.mxu0 0.0
    %105 = vmatprep.subr.mxu0 0.0
    %106 = vmatpush2.msra.mxu0 0.0
    %107 = vmatprep.subr.mxu0 0.0
    %108 = vmatpush2.msra.mxu0 0.0
    %109 = vmatprep.subr.mxu0 0.0
    %110 = vmatpush2.msra.mxu0 0.0
    %111 = vmatprep.subr.mxu0 0.0
    %112 = vmatpush2.msra.mxu0 0.0
    %113 = vmatprep.subr.mxu0 0.0
    %114 = vmatpush2.msra.mxu0 0.0
    %115 = vmatprep.subr.mxu0 0.0
    %116 = vmatpush2.msra.mxu0 0.0
    %117 = vmatprep.subr.mxu0 0.0
    %118 = vmatpush2.msra.mxu0 0.0
    %119 = vmatprep.subr.mxu0 0.0
    %120 = vmatpush2.msra.mxu0 0.0
    %121 = vmatprep.subr.mxu0 0.0
    %122 = vmatpush2.msra.mxu0 0.0
    %123 = vmatprep.subr.mxu0 0.0
    %124 = vmatpush2.msra.mxu0 0.0
    %125 = vmatprep.subr.mxu0 0.0
    %126 = vmatpush2.msra.mxu0 0.0
    %127 = vmatprep.mubr.f32.mxu0 0.0
    %128 = vmatmul.mubr.f32.gmra.mxu0 %v40
    %v129 = vpop.f32.mrf.mxu0
    %v130 = vadd.f32 0.0, %v129
    %v131 = vpop.f32.mrf.mxu0
    %132 = vmatprep.mubr.f32.mxu0 0.0
    %133 = vmatmul.mubr.f32.gmra.mxu0 %v43
    %v134 = vpop.f32.mrf.mxu0
    %v135 = vadd.f32 0.0, %v134
    %v136 = vpop.f32.mrf.mxu0
    %137 = vmatprep.mubr.f32.mxu0 0.0
    %138 = vmatmul.mubr.f32.gmra.mxu0 %v46
    %v139 = vpop.f32.mrf.mxu0
    %v140 = vadd.f32 0.0, %v139
    %v141 = vpop.f32.mrf.mxu0
    %142 = vmatprep.mubr.f32.mxu0 0.0
    %143 = vmatmul.mubr.f32.gmra.mxu0 %v49
    %v144 = vpop.f32.mrf.mxu0
    %v145 = vadd.f32 0.0, %v144
    %v146 = vpop.f32.mrf.mxu0
    %147 = vmatprep.mubr.f32.mxu0 0.0
    %148 = vmatmul.mubr.f32.gmra.mxu0 %v52
    %v149 = vpop.f32.mrf.mxu0
    %v150 = vadd.f32 0.0, %v149
    %v151 = vpop.f32.mrf.mxu0
    %152 = vmatprep.mubr.f32.mxu0 0.0
    %153 = vmatmul.mubr.f32.gmra.mxu0 %v55
    %v154 = vpop.f32.mrf.mxu0
    %v155 = vadd.f32 0.0, %v154
    %v156 = vpop.f32.mrf.mxu0
    %157 = vmatprep.mubr.f32.mxu0 0.0
    %158 = vmatmul.mubr.f32.gmra.mxu0 %v58
    %v159 = vpop.f32.mrf.mxu0
    %v160 = vadd.f32 0.0, %v159
    %v161 = vpop.f32.mrf.mxu0
    %162 = vmatprep.mubr.f32.mxu0 0.0
    %163 = vmatmul.mubr.f32.gmra.mxu0 %v61
    %v164 = vpop.f32.mrf.mxu0
    %v165 = vadd.f32 0.0, %v164
    %v166 = vpop.f32.mrf.mxu0
    %167 = vdwg.mxu0
    %v168 = vlaneseq
    %v169 = vand.u32 %v168, 127
    %vm170 = vcmp.lt.s32.totalorder %v169, 64
    %v171 = vsel %vm170, %v20, 0.0
    %v172 = vsel %vm170, %v21, 0.0
    %v173 = vsel %vm170, %v22, 0.0
    %v174 = vsel %vm170, %v23, 0.0
    %v175 = vsel %vm170, %v24, 0.0
    %v176 = vsel %vm170, %v25, 0.0
    %v177 = vsel %vm170, %v26, 0.0
    %v178 = vsel %vm170, %v27, 0.0
    %v179 = vsel %vm38, %v171, 0.0
    %180 = vadd.xlane.f32.xlu0 %v179
    %v181 = vpop.xlane.xlu0 %180
    %v182 = vsel %vm38, %v172, 0.0
    %183 = vadd.xlane.f32.xlu0 %v182
    %v184 = vpop.xlane.xlu0 %183
    %v185 = vsel %vm38, %v173, 0.0
    %186 = vadd.xlane.f32.xlu0 %v185
    %v187 = vpop.xlane.xlu0 %186
    %v188 = vsel %vm38, %v174, 0.0
    %189 = vadd.xlane.f32.xlu0 %v188
    %v190 = vpop.xlane.xlu0 %189
    %v191 = vsel %vm38, %v175, 0.0
    %192 = vadd.xlane.f32.xlu0 %v191
    %v193 = vpop.xlane.xlu0 %192
    %v194 = vsel %vm38, %v176, 0.0
    %195 = vadd.xlane.f32.xlu0 %v194
    %v196 = vpop.xlane.xlu0 %195
    %v197 = vsel %vm38, %v177, 0.0
    %198 = vadd.xlane.f32.xlu0 %v197
    %v199 = vpop.xlane.xlu0 %198
    %v200 = vsel %vm38, %v178, 0.0
    %201 = vadd.xlane.f32.xlu0 %v200
    %v202 = vpop.xlane.xlu0 %201
    %v203 = vsel %vm38, %v20, 0.0
    %204 = vadd.xlane.f32.xlu0 %v203
    %v205 = vpop.xlane.xlu0 %204
    %v206 = vsel %vm38, %v21, 0.0
    %207 = vadd.xlane.f32.xlu0 %v206
    %v208 = vpop.xlane.xlu0 %207
    %v209 = vsel %vm38, %v22, 0.0
    %210 = vadd.xlane.f32.xlu0 %v209
    %v211 = vpop.xlane.xlu0 %210
    %v212 = vsel %vm38, %v23, 0.0
    %213 = vadd.xlane.f32.xlu0 %v212
    %v214 = vpop.xlane.xlu0 %213
    %v215 = vsel %vm38, %v24, 0.0
    %216 = vadd.xlane.f32.xlu0 %v215
    %v217 = vpop.xlane.xlu0 %216
    %v218 = vsel %vm38, %v25, 0.0
    %219 = vadd.xlane.f32.xlu0 %v218
    %v220 = vpop.xlane.xlu0 %219
    %v221 = vsel %vm38, %v26, 0.0
    %222 = vadd.xlane.f32.xlu0 %v221
    %v223 = vpop.xlane.xlu0 %222
    %v224 = vsel %vm38, %v27, 0.0
    %225 = vadd.xlane.f32.xlu0 %v224
    %v226 = vpop.xlane.xlu0 %225
    %v227 = vsub.f32 %v205, %v181
    %v228 = vsub.f32 %v208, %v184
    %v229 = vsub.f32 %v211, %v187
    %v230 = vsub.f32 %v214, %v190
    %v231 = vsub.f32 %v217, %v193
    %v232 = vsub.f32 %v220, %v196
    %v233 = vsub.f32 %v223, %v199
    %v234 = vsub.f32 %v226, %v202
    %vm235 = vcmp.gt.f32.partialorder %v181, 0.0
    %vm236 = vcmp.gt.f32.partialorder %v184, 0.0
    %vm237 = vcmp.gt.f32.partialorder %v187, 0.0
    %vm238 = vcmp.gt.f32.partialorder %v190, 0.0
    %vm239 = vcmp.gt.f32.partialorder %v193, 0.0
    %vm240 = vcmp.gt.f32.partialorder %v196, 0.0
    %vm241 = vcmp.gt.f32.partialorder %v199, 0.0
    %vm242 = vcmp.gt.f32.partialorder %v202, 0.0
    %v243 = vmax.f32 %v181, 1.0
    %v244 = vmax.f32 %v184, 1.0
    %v245 = vmax.f32 %v187, 1.0
    %v246 = vmax.f32 %v190, 1.0
    %v247 = vmax.f32 %v193, 1.0
    %v248 = vmax.f32 %v196, 1.0
    %v249 = vmax.f32 %v199, 1.0
    %v250 = vmax.f32 %v202, 1.0
    %v251 = vrcp.pop %v243
    %v252 = vrcp.pop %v244
    %v253 = vrcp.pop %v245
    %v254 = vrcp.pop %v246
    %v255 = vrcp.pop %v247
    %v256 = vrcp.pop %v248
    %v257 = vrcp.pop %v249
    %v258 = vrcp.pop %v250
    %v259 = vsel %vm235, %v251, 0.0
    %v260 = vsel %vm236, %v252, 0.0
    %v261 = vsel %vm237, %v253, 0.0
    %v262 = vsel %vm238, %v254, 0.0
    %v263 = vsel %vm239, %v255, 0.0
    %v264 = vsel %vm240, %v256, 0.0
    %v265 = vsel %vm241, %v257, 0.0
    %v266 = vsel %vm242, %v258, 0.0
    %vm267 = vcmp.gt.f32.partialorder %v227, 0.0
    %vm268 = vcmp.gt.f32.partialorder %v228, 0.0
    %vm269 = vcmp.gt.f32.partialorder %v229, 0.0
    %vm270 = vcmp.gt.f32.partialorder %v230, 0.0
    %vm271 = vcmp.gt.f32.partialorder %v231, 0.0
    %vm272 = vcmp.gt.f32.partialorder %v232, 0.0
    %vm273 = vcmp.gt.f32.partialorder %v233, 0.0
    %vm274 = vcmp.gt.f32.partialorder %v234, 0.0
    %v275 = vmax.f32 %v227, 1.0
    %v276 = vmax.f32 %v228, 1.0
    %v277 = vmax.f32 %v229, 1.0
    %v278 = vmax.f32 %v230, 1.0
    %v279 = vmax.f32 %v231, 1.0
    %v280 = vmax.f32 %v232, 1.0
    %v281 = vmax.f32 %v233, 1.0
    %v282 = vmax.f32 %v234, 1.0
    %v283 = vrcp.pop %v275
    %v284 = vrcp.pop %v276
    %v285 = vrcp.pop %v277
    %v286 = vrcp.pop %v278
    %v287 = vrcp.pop %v279
    %v288 = vrcp.pop %v280
    %v289 = vrcp.pop %v281
    %v290 = vrcp.pop %v282
    %v291 = vsel %vm267, %v283, 0.0
    %v292 = vsel %vm268, %v284, 0.0
    %v293 = vsel %vm269, %v285, 0.0
    %v294 = vsel %vm270, %v286, 0.0
    %v295 = vsel %vm271, %v287, 0.0
    %v296 = vsel %vm272, %v288, 0.0
    %v297 = vsel %vm273, %v289, 0.0
    %v298 = vsel %vm274, %v290, 0.0
    %vm299 = vcmp.lt.s32.totalorder %v169, 32
    %v300 = vsel %vm299, %v259, %v291
    %v301 = vsel %vm299, %v260, %v292
    %v302 = vsel %vm299, %v261, %v293
    %v303 = vsel %vm299, %v262, %v294
    %v304 = vsel %vm299, %v263, %v295
    %v305 = vsel %vm299, %v264, %v296
    %v306 = vsel %vm299, %v265, %v297
    %v307 = vsel %vm299, %v266, %v298
    %v308 = vmul.f32 %v130, %v300
    %v309 = vmul.f32 %v135, %v301
    %v310 = vmul.f32 %v140, %v302
    %v311 = vmul.f32 %v145, %v303
    %v312 = vmul.f32 %v150, %v304
    %v313 = vmul.f32 %v155, %v305
    %v314 = vmul.f32 %v160, %v306
    %v315 = vmul.f32 %v165, %v307
    %vm316 = vcmask 523264
    %317 = vst.msk [vmem:[#allocation2] sm:$0xff] %vm316, %v308
    %318 = vst.msk [vmem:[#allocation2 + $0x8] sm:$0xff] %vm316, %v309
    %319 = vst.msk [vmem:[#allocation2 + $0x10] sm:$0xff] %vm316, %v310
    %320 = vst.msk [vmem:[#allocation2 + $0x18] sm:$0xff] %vm316, %v311
    %321 = vst.msk [vmem:[#allocation2 + $0x20] sm:$0xff] %vm316, %v312
    %322 = vst.msk [vmem:[#allocation2 + $0x28] sm:$0xff] %vm316, %v313
    %323 = vst.msk [vmem:[#allocation2 + $0x30] sm:$0xff] %vm316, %v314
    %324 = vst.msk [vmem:[#allocation2 + $0x38] sm:$0xff] %vm316, %v315
    // Predicated region
    $region10: #{tpu_custom_call.1} parent=1 // pred_check
      _
    $region11: #{tpu_custom_call.1} parent=1 // pred_check_branch
      %326 = sbr.rel (0) target = $region13
    $region12: #{tpu_custom_call.1} parent=1 // pred_region
      %s328 = ssub.s32 1024, 1024
      %329 = vsyncadd [#allocation3], %s328
      %s330 = sshll.u32 [#allocation2], 4
      %s331 = int_to_ptr.vmem [resolvable:$true] %s330
      %336 = dma.vmem_to_hbm [thread:$0]  %s331, 1024, %s2, [#allocation3], 128, 128, 8
    $region13: #{tpu_custom_call.1} parent=1 // pred_fallthru
      _
    // Predicated region
    $region14: #{tpu_custom_call.1} parent=1 // pred_check
      _
    $region15: #{tpu_custom_call.1} parent=1 // pred_check_branch
      %338 = sbr.rel (0) target = $region17
    $region16: #{tpu_custom_call.1} parent=1 // pred_region
      %339 = dma.done [#allocation3], 1024
    $region17: #{tpu_custom_call.1} parent=1 // pred_fallthru
      _
    %340 = vsyncpa [#allocation3], 1

</llo_original>
